<compile_context>
chip_gen: v7x
topology: tpu7x:2x2x1
jax: 0.10.0
libtpu: 0.0.40
codegen_flags: <defaults>
</compile_context>

<pallas_src>
import jax
import jax.numpy as jnp
from jax.experimental import pallas as pl
from jax.experimental.pallas import tpu as pltpu


def _se_block_kernel(x_ref, w1t_ref, b1_ref, w2_ref, b2_ref, o_ref):
    """One batch sample.

    x_ref  : [C, HW]   activation slab (H*W on lanes)
    w1t_ref: [C, Cr]   fc1 weight, transposed from PyTorch [Cr, C]
    b1_ref : [1, Cr]
    w2_ref : [C, Cr]   fc2 weight (PyTorch layout)
    b2_ref : [C, 1]
    o_ref  : [C, HW]   x * sigmoid(fc2(relu(fc1(mean_HW(x)))))
    """
    x = x_ref[...]                                              # [C, HW] f32
    hw = x.shape[1]
    # Squeeze: global average pool over H*W (lane reduction).
    mean = jnp.sum(x, axis=1, keepdims=True) * (1.0 / hw)       # [C, 1]
    # Excite, fc1 + ReLU:  h[j] = relu(sum_c W1[j,c] * mean[c] + b1[j])
    h = jnp.sum(w1t_ref[...] * mean, axis=0, keepdims=True) + b1_ref[...]  # [1, Cr]
    h = jnp.maximum(h, 0.0)
    # fc2 + sigmoid:  z[c] = sum_j W2[c,j] * h[j] + b2[c]
    z = jnp.sum(w2_ref[...] * h, axis=1, keepdims=True) + b2_ref[...]      # [C, 1]
    s = 1.0 / (1.0 + jnp.exp(-z))                                          # [C, 1]
    # Scale: per-channel gate broadcast over the spatial (lane) axis.
    o_ref[...] = x * s


def se_block_forward(x_nchw, params):
    """SEBlock1.forward.  x_nchw: [B, C, H, W]; params use PyTorch layouts."""
    b, c, h, w = x_nchw.shape
    hw = h * w
    cr = params['fc1_w'].shape[0]

    x2 = x_nchw.reshape(b, c, hw).astype(jnp.float32)           # free reshape
    # Tiny parameter-layout prep (C*Cr elements); keeps the kernel transpose-free.
    w1t = params['fc1_w'].T.astype(jnp.float32)                 # [C, Cr]
    b1r = params['fc1_b'].reshape(1, cr).astype(jnp.float32)    # [1, Cr]
    w2 = params['fc2_w'].astype(jnp.float32)                    # [C, Cr]
    b2c = params['fc2_b'].reshape(c, 1).astype(jnp.float32)     # [C, 1]

    def rep(shape):  # small replicated (per-grid-step) operand
        return pl.BlockSpec(shape, lambda i: (0, 0))

    out = pl.pallas_call(
        _se_block_kernel,
        out_shape=jax.ShapeDtypeStruct((b, c, hw), jnp.float32),
        grid_spec=pltpu.PrefetchScalarGridSpec(
            num_scalar_prefetch=0,
            grid=(b,),
            in_specs=[pl.BlockSpec((None, c, hw), lambda i: (i, 0, 0)),
                      rep((c, cr)), rep((1, cr)),
                      rep((c, cr)), rep((c, 1))],
            out_specs=pl.BlockSpec((None, c, hw), lambda i: (i, 0, 0))),
        compiler_params=pltpu.CompilerParams(
            dimension_semantics=("parallel",)),
    )(x2, w1t, b1r, w2, b2c)
    return out.reshape(b, c, h, w)


def se_block_ref(x, params):
    """Pure-JAX reference matching the PyTorch module."""
    pooled = jnp.mean(x, axis=(2, 3))                                   # [B, C]
    hid = jnp.maximum(pooled @ params['fc1_w'].T + params['fc1_b'], 0.0)
    gate = jax.nn.sigmoid(hid @ params['fc2_w'].T + params['fc2_b'])    # [B, C]
    return x * gate[:, :, None, None]


if __name__ == "__main__":
    key = jax.random.PRNGKey(0)
    # reduction_ratio defaults to 16, so pick C = 32 -> hidden = 2.
    B, C, H, W = 2, 32, 16, 16
    reduction_ratio = 16
    Cr = C // reduction_ratio

    kx, k1, k2, k3, k4 = jax.random.split(key, 5)
    x = jax.random.normal(kx, (B, C, H, W), jnp.float32)
    params = {
        'fc1_w': 0.1 * jax.random.normal(k1, (Cr, C), jnp.float32),  # nn.Linear(C, Cr)
        'fc1_b': 0.1 * jax.random.normal(k2, (Cr,), jnp.float32),
        'fc2_w': 0.1 * jax.random.normal(k3, (C, Cr), jnp.float32),  # nn.Linear(Cr, C)
        'fc2_b': 0.1 * jax.random.normal(k4, (C,), jnp.float32),
    }

    fwd = jax.jit(se_block_forward)
    out = jax.block_until_ready(fwd(x, params))
    assert out.shape == (B, C, H, W) and out.dtype == jnp.float32

    ref = se_block_ref(x, params)
    assert jnp.allclose(out, ref, atol=1e-4, rtol=1e-4), "mismatch vs reference"

    print("KERNEL_OK")
</pallas_src>

<mosaic_0001>
module attributes {stable_mosaic.version = 11 : i64} {
  func.func @_se_block_kernel(%arg0: i32, %arg1: memref<1x32x256xf32, #tpu.memory_space<vmem>>, %arg2: memref<32x2xf32, #tpu.memory_space<vmem>>, %arg3: memref<1x2xf32, #tpu.memory_space<vmem>>, %arg4: memref<32x2xf32, #tpu.memory_space<vmem>>, %arg5: memref<32x1xf32, #tpu.memory_space<vmem>>, %arg6: memref<1x32x256xf32, #tpu.memory_space<vmem>>) attributes {dimension_semantics = [#tpu.dimension_semantics<parallel>], iteration_bounds = array<i64: 2>, scalar_prefetch = 0 : i64, scratch_operands = 0 : i64, tpu.core_type = #tpu.core_type<tc>, window_params = [{transform_indices = @transform_0, window_bounds = array<i64: 1, 32, 256>}, {pipeline_mode = #tpu.pipeline_mode<synchronous>, transform_indices = @transform_1, window_bounds = array<i64: 32, 2>}, {pipeline_mode = #tpu.pipeline_mode<synchronous>, transform_indices = @transform_2, window_bounds = array<i64: 1, 2>}, {pipeline_mode = #tpu.pipeline_mode<synchronous>, transform_indices = @transform_3, window_bounds = array<i64: 32, 2>}, {pipeline_mode = #tpu.pipeline_mode<synchronous>, transform_indices = @transform_4, window_bounds = array<i64: 32, 1>}, {transform_indices = @transform_5, window_bounds = array<i64: 1, 32, 256>}]} {
    %c0 = arith.constant 0 : index
    %c0_0 = arith.constant 0 : index
    %c0_1 = arith.constant 0 : index
    %0 = vector.load %arg1[%c0, %c0_0, %c0_1] : memref<1x32x256xf32, #tpu.memory_space<vmem>>, vector<1x32x256xf32>
    %1 = vector.shape_cast %0 : vector<1x32x256xf32> to vector<32x256xf32>
    %cst = arith.constant dense<0.000000e+00> : vector<32xf32>
    %2 = vector.multi_reduction <add>, %1, %cst [1] : vector<32x256xf32> to vector<32xf32>
    %3 = vector.shape_cast %2 : vector<32xf32> to vector<32x1xf32>
    %cst_2 = arith.constant 3.906250e-03 : f32
    %4 = vector.broadcast %cst_2 : f32 to vector<32x1xf32>
    %5 = arith.mulf %3, %4 : vector<32x1xf32>
    %c0_3 = arith.constant 0 : index
    %c0_4 = arith.constant 0 : index
    %6 = vector.load %arg2[%c0_3, %c0_4] : memref<32x2xf32, #tpu.memory_space<vmem>>, vector<32x2xf32>
    %7 = vector.broadcast %5 : vector<32x1xf32> to vector<32x2xf32>
    %8 = arith.mulf %6, %7 : vector<32x2xf32>
    %cst_5 = arith.constant dense<0.000000e+00> : vector<2xf32>
    %9 = vector.multi_reduction <add>, %8, %cst_5 [0] : vector<32x2xf32> to vector<2xf32>
    %10 = vector.shape_cast %9 : vector<2xf32> to vector<1x2xf32>
    %c0_6 = arith.constant 0 : index
    %c0_7 = arith.constant 0 : index
    %11 = vector.load %arg3[%c0_6, %c0_7] : memref<1x2xf32, #tpu.memory_space<vmem>>, vector<1x2xf32>
    %12 = arith.addf %10, %11 : vector<1x2xf32>
    %cst_8 = arith.constant 0.000000e+00 : f32
    %13 = vector.broadcast %cst_8 : f32 to vector<1x2xf32>
    %14 = arith.maximumf %12, %13 : vector<1x2xf32>
    %c0_9 = arith.constant 0 : index
    %c0_10 = arith.constant 0 : index
    %15 = vector.load %arg4[%c0_9, %c0_10] : memref<32x2xf32, #tpu.memory_space<vmem>>, vector<32x2xf32>
    %16 = vector.broadcast %14 : vector<1x2xf32> to vector<32x2xf32>
    %17 = arith.mulf %15, %16 : vector<32x2xf32>
    %cst_11 = arith.constant dense<0.000000e+00> : vector<32xf32>
    %18 = vector.multi_reduction <add>, %17, %cst_11 [1] : vector<32x2xf32> to vector<32xf32>
    %19 = vector.shape_cast %18 : vector<32xf32> to vector<32x1xf32>
    %c0_12 = arith.constant 0 : index
    %c0_13 = arith.constant 0 : index
    %20 = vector.load %arg5[%c0_12, %c0_13] : memref<32x1xf32, #tpu.memory_space<vmem>>, vector<32x1xf32>
    %21 = arith.addf %19, %20 : vector<32x1xf32>
    %cst_14 = arith.constant 0.000000e+00 : f32
    %22 = vector.broadcast %cst_14 : f32 to vector<32x1xf32>
    %23 = arith.subf %22, %21 : vector<32x1xf32>
    %24 = math.exp %23 : vector<32x1xf32>
    %cst_15 = arith.constant 1.000000e+00 : f32
    %25 = vector.broadcast %cst_15 : f32 to vector<32x1xf32>
    %26 = arith.addf %25, %24 : vector<32x1xf32>
    %cst_16 = arith.constant 1.000000e+00 : f32
    %27 = vector.broadcast %cst_16 : f32 to vector<32x1xf32>
    %28 = arith.divf %27, %26 : vector<32x1xf32>
    %29 = vector.broadcast %28 : vector<32x1xf32> to vector<32x256xf32>
    %30 = arith.mulf %1, %29 : vector<32x256xf32>
    %c0_17 = arith.constant 0 : index
    %c0_18 = arith.constant 0 : index
    %c0_19 = arith.constant 0 : index
    %31 = vector.load %arg6[%c0_17, %c0_18, %c0_19] : memref<1x32x256xf32, #tpu.memory_space<vmem>>, vector<1x32x256xf32>
    %32 = vector.shape_cast %31 : vector<1x32x256xf32> to vector<32x256xf32>
    %33 = vector.shape_cast %30 : vector<32x256xf32> to vector<1x32x256xf32>
    tpu.vector_store %arg6[%c0_17, %c0_18, %c0_19], %33 {strides = array<i32>} : memref<1x32x256xf32, #tpu.memory_space<vmem>>, vector<1x32x256xf32>,
    return
  }
  func.func @transform_0(%arg0: i32) -> (i32, i32, i32) {
    %c0_i32 = arith.constant 0 : i32
    %c0_i32_0 = arith.constant 0 : i32
    %c0_i32_1 = arith.constant 0 : i32
    return %arg0, %c0_i32, %c0_i32_0 : i32, i32, i32
  }
  func.func @transform_1(%arg0: i32) -> (i32, i32) {
    %c0_i32 = arith.constant 0 : i32
    %c0_i32_0 = arith.constant 0 : i32
    %c0_i32_1 = arith.constant 0 : i32
    return %c0_i32, %c0_i32_0 : i32, i32
  }
  func.func @transform_2(%arg0: i32) -> (i32, i32) {
    %c0_i32 = arith.constant 0 : i32
    %c0_i32_0 = arith.constant 0 : i32
    %c0_i32_1 = arith.constant 0 : i32
    return %c0_i32, %c0_i32_0 : i32, i32
  }
  func.func @transform_3(%arg0: i32) -> (i32, i32) {
    %c0_i32 = arith.constant 0 : i32
    %c0_i32_0 = arith.constant 0 : i32
    %c0_i32_1 = arith.constant 0 : i32
    return %c0_i32, %c0_i32_0 : i32, i32
  }
  func.func @transform_4(%arg0: i32) -> (i32, i32) {
    %c0_i32 = arith.constant 0 : i32
    %c0_i32_0 = arith.constant 0 : i32
    %c0_i32_1 = arith.constant 0 : i32
    return %c0_i32, %c0_i32_0 : i32, i32
  }
  func.func @transform_5(%arg0: i32) -> (i32, i32, i32) {
    %c0_i32 = arith.constant 0 : i32
    %c0_i32_0 = arith.constant 0 : i32
    %c0_i32_1 = arith.constant 0 : i32
    return %arg0, %c0_i32, %c0_i32_0 : i32, i32, i32
  }
}

</mosaic_0001>

<llo_original>
// kernel: se_block_forward.1
$region0: #{se_block_forward.1}
  #allocation0 [shape = 'u32[]', space=smem, size = 0x4, offset = 0x4, fixed_abs, tag = 'smem constant byte address 0x4 - core index']
  #allocation1 [shape = 'u32[144,128]{1,0:T(1,128)}', space=vmem, size = 0x12000, scoped, tag = 'internal scratch']
  %s0 = inlined_call_operand.vmem [shape: f32[2,32,256], index: 0, kind: input, shape index: {}]
  %s1 = inlined_call_operand.vmem [shape: f32[32,2], index: 1, kind: input, shape index: {}]
  %s2 = inlined_call_operand.vmem [shape: f32[1,2], index: 2, kind: input, shape index: {}]
  %s3 = inlined_call_operand.vmem [shape: f32[32,2], index: 3, kind: input, shape index: {}]
  %s4 = inlined_call_operand.vmem [shape: f32[32,1], index: 4, kind: input, shape index: {}]
  %s5 = inlined_call_operand.vmem [shape: f32[2,32,256], index: 5, kind: output, shape index: {}]
  %s6 = sld [smem:[#allocation0]]
  $region53: #{se_block_forward.1} parent=0
    _
  %s8 = ssub.s32 1, %s6
  %s9 = scalar_select 0, %s8, %s6
  loop: start=0, step=1, limit=4
  $region2: #{se_block_forward.1} parent=0 // loop_pre_header
    _
  $region3: #{se_block_forward.1} parent=0 // loop_header
    %s11 = sphi 0, %s15
    %p12 = scmp.ge.s32.totalorder %s11, 4
    %s21 = sphi 0, %s23
    %s24 = sphi 0, %s21
    %s25 = sphi 0, %s24
    %s41 = sphi 0, %s25
    %s45 = sphi 0, %s45
    %s47 = sphi 0, %s45
    %s48 = sphi 0, %s47
    %s62 = sphi 0, %s48
    %s66 = sphi 0, %s66
    %s68 = sphi 0, %s66
    %s69 = sphi 0, %s68
    %s83 = sphi 0, %s69
    %s87 = sphi 0, %s87
    %s89 = sphi 0, %s87
    %s90 = sphi 0, %s89
    %s104 = sphi 0, %s90
    %s108 = sphi 0, %s108
    %s110 = sphi 0, %s108
    %s111 = sphi 0, %s110
    %s125 = sphi 0, %s111
    %s131 = sphi 0, %s133
    %s134 = sphi 0, %s131
    %s135 = sphi 0, %s134
    %s151 = sphi 0, %s135
  $region4: #{se_block_forward.1} parent=0 // loop_header_branch
    %14 = sbr.rel (%p12) target = $region8
  $region5: #{se_block_forward.1} parent=0 // loop_body
    %s16 = ssub.s32 %s11, 1
    %s17 = ssub.s32 %s11, 2
    %s18 = sadd.s32 %s11, 1
    %s19 = ssub.s32 %s11, %s18
    %p20 = scmp.eq.s32.totalorder %s19, 0
    %s22 = sadd.s32 %s21, 1
    %s23 = scalar_select %p20, %s21, %s22
    %p26 = pneg %p20
    %p27 = scmp.eq.s32.totalorder %s11, 1
    %p28 = por %p26, %p27
    %p29 = scmp.ne.s32.totalorder %s21, %s24
    %p30 = scmp.eq.s32.totalorder %s11, 0
    %p31 = por %p29, %p30
    %p32 = scmp.ne.s32.totalorder %s21, %s24
    %p33 = scmp.eq.s32.totalorder %s16, 1
    %p34 = por %p32, %p33
    %p35 = scmp.ne.s32.totalorder %s24, %s25
    %p36 = scmp.eq.s32.totalorder %s16, 0
    %p37 = por %p35, %p36
    %p38 = scmp.ne.s32.totalorder %s24, %s25
    %p39 = scmp.eq.s32.totalorder %s17, 1
    %p40 = por %p38, %p39
    %p42 = scmp.ne.s32.totalorder %s25, %s41
    %p43 = scmp.eq.s32.totalorder %s17, 0
    %p44 = por %p42, %p43
    %s46 = sadd.s32 %s45, 1
    %p49 = scmp.eq.s32.totalorder %s11, 1
    %p50 = scmp.ne.s32.totalorder %s45, %s47
    %p51 = scmp.eq.s32.totalorder %s11, 0
    %p52 = por %p50, %p51
    %p53 = scmp.ne.s32.totalorder %s45, %s47
    %p54 = scmp.eq.s32.totalorder %s16, 1
    %p55 = por %p53, %p54
    %p56 = scmp.ne.s32.totalorder %s47, %s48
    %p57 = scmp.eq.s32.totalorder %s16, 0
    %p58 = por %p56, %p57
    %p59 = scmp.ne.s32.totalorder %s47, %s48
    %p60 = scmp.eq.s32.totalorder %s17, 1
    %p61 = por %p59, %p60
    %p63 = scmp.ne.s32.totalorder %s48, %s62
    %p64 = scmp.eq.s32.totalorder %s17, 0
    %p65 = por %p63, %p64
    %s67 = sadd.s32 %s66, 1
    %p70 = scmp.eq.s32.totalorder %s11, 1
    %p71 = scmp.ne.s32.totalorder %s66, %s68
    %p72 = scmp.eq.s32.totalorder %s11, 0
    %p73 = por %p71, %p72
    %p74 = scmp.ne.s32.totalorder %s66, %s68
    %p75 = scmp.eq.s32.totalorder %s16, 1
    %p76 = por %p74, %p75
    %p77 = scmp.ne.s32.totalorder %s68, %s69
    %p78 = scmp.eq.s32.totalorder %s16, 0
    %p79 = por %p77, %p78
    %p80 = scmp.ne.s32.totalorder %s68, %s69
    %p81 = scmp.eq.s32.totalorder %s17, 1
    %p82 = por %p80, %p81
    %p84 = scmp.ne.s32.totalorder %s69, %s83
    %p85 = scmp.eq.s32.totalorder %s17, 0
    %p86 = por %p84, %p85
    %s88 = sadd.s32 %s87, 1
    %p91 = scmp.eq.s32.totalorder %s11, 1
    %p92 = scmp.ne.s32.totalorder %s87, %s89
    %p93 = scmp.eq.s32.totalorder %s11, 0
    %p94 = por %p92, %p93
    %p95 = scmp.ne.s32.totalorder %s87, %s89
    %p96 = scmp.eq.s32.totalorder %s16, 1
    %p97 = por %p95, %p96
    %p98 = scmp.ne.s32.totalorder %s89, %s90
    %p99 = scmp.eq.s32.totalorder %s16, 0
    %p100 = por %p98, %p99
    %p101 = scmp.ne.s32.totalorder %s89, %s90
    %p102 = scmp.eq.s32.totalorder %s17, 1
    %p103 = por %p101, %p102
    %p105 = scmp.ne.s32.totalorder %s90, %s104
    %p106 = scmp.eq.s32.totalorder %s17, 0
    %p107 = por %p105, %p106
    %s109 = sadd.s32 %s108, 1
    %p112 = scmp.eq.s32.totalorder %s11, 1
    %p113 = scmp.ne.s32.totalorder %s108, %s110
    %p114 = scmp.eq.s32.totalorder %s11, 0
    %p115 = por %p113, %p114
    %p116 = scmp.ne.s32.totalorder %s108, %s110
    %p117 = scmp.eq.s32.totalorder %s16, 1
    %p118 = por %p116, %p117
    %p119 = scmp.ne.s32.totalorder %s110, %s111
    %p120 = scmp.eq.s32.totalorder %s16, 0
    %p121 = por %p119, %p120
    %p122 = scmp.ne.s32.totalorder %s110, %s111
    %p123 = scmp.eq.s32.totalorder %s17, 1
    %p124 = por %p122, %p123
    %p126 = scmp.ne.s32.totalorder %s111, %s125
    %p127 = scmp.eq.s32.totalorder %s17, 0
    %p128 = por %p126, %p127
    %s129 = ssub.s32 %s11, %s18
    %p130 = scmp.eq.s32.totalorder %s129, 0
    %s132 = sadd.s32 %s131, 1
    %s133 = scalar_select %p130, %s131, %s132
    %p136 = pneg %p130
    %p137 = scmp.eq.s32.totalorder %s11, 1
    %p138 = por %p136, %p137
    %p139 = scmp.ne.s32.totalorder %s131, %s134
    %p140 = scmp.eq.s32.totalorder %s11, 0
    %p141 = por %p139, %p140
    %p142 = scmp.ne.s32.totalorder %s131, %s134
    %p143 = scmp.eq.s32.totalorder %s16, 1
    %p144 = por %p142, %p143
    %p145 = scmp.ne.s32.totalorder %s134, %s135
    %p146 = scmp.eq.s32.totalorder %s16, 0
    %p147 = por %p145, %p146
    %p148 = scmp.ne.s32.totalorder %s134, %s135
    %p149 = scmp.eq.s32.totalorder %s17, 1
    %p150 = por %p148, %p149
    %p152 = scmp.ne.s32.totalorder %s135, %s151
    %p153 = scmp.eq.s32.totalorder %s17, 0
    %p154 = por %p152, %p153
    %p155 = scmp.le.s32.totalorder 1, %s11
    %p156 = scmp.lt.s32.totalorder %s11, 3
    %p157 = pnand %p155, %p156
    %p158 = pneg %p157
    // Predicated region
    $region9: #{se_block_forward.1} parent=5 // pred_check
      _
    $region10: #{se_block_forward.1} parent=5 // pred_check_branch
      %160 = sbr.rel (%p157) target = $region12
    $region11: #{se_block_forward.1} parent=5 // pred_region
      %s161 = ssub.s32 %s11, 1
      // Predicated region
      $region13: #{se_block_forward.1} parent=11 // pred_check
        %p162 = pneg %p58
      $region14: #{se_block_forward.1} parent=11 // pred_check_branch
        %164 = sbr.rel (%p162) target = $region16
      $region15: #{se_block_forward.1} parent=11 // pred_region
        _
      $region16: #{se_block_forward.1} parent=11 // pred_fallthru
        _
      // Predicated region
      $region17: #{se_block_forward.1} parent=11 // pred_check
        %p165 = pneg %p79
      $region18: #{se_block_forward.1} parent=11 // pred_check_branch
        %167 = sbr.rel (%p165) target = $region20
      $region19: #{se_block_forward.1} parent=11 // pred_region
        _
      $region20: #{se_block_forward.1} parent=11 // pred_fallthru
        _
      // Predicated region
      $region21: #{se_block_forward.1} parent=11 // pred_check
        %p168 = pneg %p100
      $region22: #{se_block_forward.1} parent=11 // pred_check_branch
        %170 = sbr.rel (%p168) target = $region24
      $region23: #{se_block_forward.1} parent=11 // pred_region
        _
      $region24: #{se_block_forward.1} parent=11 // pred_fallthru
        _
      // Predicated region
      $region25: #{se_block_forward.1} parent=11 // pred_check
        %p171 = pneg %p121
      $region26: #{se_block_forward.1} parent=11 // pred_check_branch
        %173 = sbr.rel (%p171) target = $region28
      $region27: #{se_block_forward.1} parent=11 // pred_region
        _
      $region28: #{se_block_forward.1} parent=11 // pred_fallthru
        _
    $region12: #{se_block_forward.1} parent=5 // pred_fallthru
      _
    %p174 = scmp.lt.s32.totalorder %s11, 2
    // Predicated region
    $region29: #{se_block_forward.1} parent=5 // pred_check
      %p175 = pneg %p174
    $region30: #{se_block_forward.1} parent=5 // pred_check_branch
      %177 = sbr.rel (%p175) target = $region32
    $region31: #{se_block_forward.1} parent=5 // pred_region
      // Predicated region
      $region33: #{se_block_forward.1} parent=31 // pred_check
        %p178 = pneg %p31
      $region34: #{se_block_forward.1} parent=31 // pred_check_branch
        %180 = sbr.rel (%p178) target = $region36
      $region35: #{se_block_forward.1} parent=31 // pred_region
        %p181 = scmp.lt.s32.totalorder %s11, 1
        %s182 = scalar_select %p181, %s11, 1
        %s183 = smul.addr %s182, 8
        %s184 = smul.addr %s183, 8
        %s185 = scalar_lea.vmem %s0, %s184
      $region36: #{se_block_forward.1} parent=31 // pred_fallthru
        _
    $region32: #{se_block_forward.1} parent=5 // pred_fallthru
      _
    %p186 = scmp.le.s32.totalorder 1, %s11
    %p187 = scmp.lt.s32.totalorder %s11, 3
    %p188 = pnand %p186, %p187
    %p189 = pneg %p188
    // Predicated region
    $region37: #{se_block_forward.1} parent=5 // pred_check
      _
    $region38: #{se_block_forward.1} parent=5 // pred_check_branch
      %191 = sbr.rel (%p188) target = $region40
    $region39: #{se_block_forward.1} parent=5 // pred_region
      %s192 = ssub.s32 %s11, 1
      %p193 = scmp.lt.s32.totalorder %s16, 1
      %s194 = scalar_select %p193, %s16, 1
      %s195 = smul.addr %s194, 8
      %s196 = smul.addr %s195, 8
      %s197 = scalar_lea.vmem %s0, %s196
      %p198 = pneg %p37
      %p199 = pneg %p34
      %p200 = pneg %p58
      %p201 = pneg %p55
      %p202 = pneg %p79
      %p203 = pneg %p76
      %p204 = pneg %p100
      %p205 = pneg %p97
      %p206 = pneg %p121
      %p207 = pneg %p118
      %p208 = pneg %p147
      %p209 = pneg %p144
      %p210 = scmp.lt.s32.totalorder %s16, 1
      %s211 = scalar_select %p210, %s16, 1
      %s212 = smul.addr %s211, 8
      %s213 = smul.addr %s212, 8
      %s214 = scalar_lea.vmem %s5, %s213
      %p215 = scmp.lt.s32.totalorder %s16, 1
      %s216 = scalar_select %p215, %s16, 1
      %s217 = smul.addr %s216, 8
      %s218 = smul.addr %s217, 8
      %s219 = scalar_lea.vmem %s0, %s218
      %p220 = scmp.lt.s32.totalorder %s16, 1
      %s221 = scalar_select %p220, %s16, 1
      %s222 = smul.addr %s221, 8
      %s223 = smul.addr %s222, 8
      %s224 = scalar_lea.vmem %s5, %s223
      %v225 = vld [vmem:[%s219] sm:$0xff]
      %v226 = vld [vmem:[%s219 + $0x8] sm:$0xff]
      %v227 = vld [vmem:[%s219 + $0x10] sm:$0xff]
      %v228 = vld [vmem:[%s219 + $0x18] sm:$0xff]
      %v229 = vld [vmem:[%s219 + $0x20] sm:$0xff]
      %v230 = vld [vmem:[%s219 + $0x28] sm:$0xff]
      %v231 = vld [vmem:[%s219 + $0x30] sm:$0xff]
      %v232 = vld [vmem:[%s219 + $0x38] sm:$0xff]
      %v233 = vadd.f32 %v225, %v226
      %234 = vadd.xlane.f32.xlu0 %v233
      %v235 = vpop.xlane.xlu0 %234
      %v236 = vadd.f32 %v227, %v228
      %237 = vadd.xlane.f32.xlu0 %v236
      %v238 = vpop.xlane.xlu0 %237
      %v239 = vadd.f32 %v229, %v230
      %240 = vadd.xlane.f32.xlu0 %v239
      %v241 = vpop.xlane.xlu0 %240
      %v242 = vadd.f32 %v231, %v232
      %243 = vadd.xlane.f32.xlu0 %v242
      %v244 = vpop.xlane.xlu0 %243
      %v245 = vmul.f32 %v235, 0.00390625
      %v246 = vmul.f32 %v238, 0.00390625
      %v247 = vmul.f32 %v241, 0.00390625
      %v248 = vmul.f32 %v244, 0.00390625
      %v249 = vld [vmem:[%s1] sm:$0xff]
      %v250 = vld [vmem:[%s1 + $0x8] sm:$0xff]
      %v251 = vld [vmem:[%s1 + $0x10] sm:$0xff]
      %v252 = vld [vmem:[%s1 + $0x18] sm:$0xff]
      %v253 = vmul.f32 %v249, %v245
      %v254 = vmul.f32 %v250, %v246
      %v255 = vmul.f32 %v251, %v247
      %v256 = vmul.f32 %v252, %v248
      %vm257 = vcmask 15360
      %v258 = vsel %vm257, %v253, 0.0
      %v259 = vsel %vm257, %v254, 0.0
      %v260 = vadd.f32 %v258, %v259
      %v261 = vsel %vm257, %v255, 0.0
      %v262 = vadd.f32 %v260, %v261
      %v263 = vsel %vm257, %v256, 0.0
      %v264 = vadd.f32 %v262, %v263
      %v265 = vrot.slane %v264, 4
      %v266 = vadd.f32 %v264, %v265
      %v267 = vrot.slane %v266, 2
      %v268 = vadd.f32 %v266, %v267
      %v269 = vrot.slane %v268, 1
      %v270 = vadd.f32 %v268, %v269
      %v271 = vld [vmem:[%s2] sm:$0x1]
      %v272 = vadd.f32 %v270, %v271
      %v273 = vmax.f32 %v272, 0.0
      %v274 = vld [vmem:[%s3] sm:$0xff]
      %v275 = vld [vmem:[%s3 + $0x8] sm:$0xff]
      %v276 = vld [vmem:[%s3 + $0x10] sm:$0xff]
      %v277 = vld [vmem:[%s3 + $0x18] sm:$0xff]
      %v278 = vlaneseq
      %v279 = vshrl.u32 %v278, 7
      %v280 = vsub.s32 0, %v279
      %v281 = vrot.slane %v273, %v280
      %v282 = vmul.f32 %v274, %v281
      %v283 = vmul.f32 %v275, %v281
      %v284 = vmul.f32 %v276, %v281
      %v285 = vmul.f32 %v277, %v281
      %v286 = vsel %vm257, %v282, 0.0
      %287 = vadd.xlane.f32.xlu0 %v286
      %v288 = vpop.xlane.xlu0 %287
      %v289 = vsel %vm257, %v283, 0.0
      %290 = vadd.xlane.f32.xlu0 %v289
      %v291 = vpop.xlane.xlu0 %290
      %v292 = vsel %vm257, %v284, 0.0
      %293 = vadd.xlane.f32.xlu0 %v292
      %v294 = vpop.xlane.xlu0 %293
      %v295 = vsel %vm257, %v285, 0.0
      %296 = vadd.xlane.f32.xlu0 %v295
      %v297 = vpop.xlane.xlu0 %296
      %v298 = vld [vmem:[%s4] sm:$0xff]
      %v299 = vld [vmem:[%s4 + $0x8] sm:$0xff]
      %v300 = vld [vmem:[%s4 + $0x10] sm:$0xff]
      %v301 = vld [vmem:[%s4 + $0x18] sm:$0xff]
      %v302 = vadd.f32 %v288, %v298
      %v303 = vadd.f32 %v291, %v299
      %v304 = vadd.f32 %v294, %v300
      %v305 = vadd.f32 %v297, %v301
      %v306 = vsub.f32 0.0, %v302
      %v307 = vsub.f32 0.0, %v303
      %v308 = vsub.f32 0.0, %v304
      %v309 = vsub.f32 0.0, %v305
      %v310 = vmul.f32 %v306, 1.442695
      %v311 = vpow.pop %v310
      %v312 = vmul.f32 %v307, 1.442695
      %v313 = vpow.pop %v312
      %v314 = vmul.f32 %v308, 1.442695
      %v315 = vpow.pop %v314
      %v316 = vmul.f32 %v309, 1.442695
      %v317 = vpow.pop %v316
      %v318 = vadd.f32 %v311, 1.0
      %v319 = vadd.f32 %v313, 1.0
      %v320 = vadd.f32 %v315, 1.0
      %v321 = vadd.f32 %v317, 1.0
      %v322 = vrcp.pop %v318
      %v323 = vmul.f32 1.0, %v322
      %v324 = vrcp.pop %v319
      %v325 = vmul.f32 1.0, %v324
      %v326 = vrcp.pop %v320
      %v327 = vmul.f32 1.0, %v326
      %v328 = vrcp.pop %v321
      %v329 = vmul.f32 1.0, %v328
      %331 = vset.pattern.permute.xlu0 0
      %332 = vperm.xlu0 %331, %v323
      %v333 = vpop.permute.xlu0 %332
      %336 = vset.pattern.permute.xlu0 0
      %337 = vperm.xlu0 %336, %v325
      %v338 = vpop.permute.xlu0 %337
      %341 = vset.pattern.permute.xlu0 0
      %342 = vperm.xlu0 %341, %v327
      %v343 = vpop.permute.xlu0 %342
      %346 = vset.pattern.permute.xlu0 0
      %347 = vperm.xlu0 %346, %v329
      %v348 = vpop.permute.xlu0 %347
      %v350 = vmul.f32 %v225, %v333
      %v351 = vmul.f32 %v226, %v333
      %v352 = vmul.f32 %v227, %v338
      %v353 = vmul.f32 %v228, %v338
      %v354 = vmul.f32 %v229, %v343
      %v355 = vmul.f32 %v230, %v343
      %v356 = vmul.f32 %v231, %v348
      %v357 = vmul.f32 %v232, %v348
      %358 = vst [vmem:[%s224] sm:$0xff] %v350
      %359 = vst [vmem:[%s224 + $0x8] sm:$0xff] %v351
      %360 = vst [vmem:[%s224 + $0x10] sm:$0xff] %v352
      %361 = vst [vmem:[%s224 + $0x18] sm:$0xff] %v353
      %362 = vst [vmem:[%s224 + $0x20] sm:$0xff] %v354
      %363 = vst [vmem:[%s224 + $0x28] sm:$0xff] %v355
      %364 = vst [vmem:[%s224 + $0x30] sm:$0xff] %v356
      %365 = vst [vmem:[%s224 + $0x38] sm:$0xff] %v357
      %p366 = scmp.lt.s32.totalorder %s16, 1
      %s367 = scalar_select %p366, %s16, 1
      %s368 = smul.addr %s367, 8
      %s369 = smul.addr %s368, 8
      %s370 = scalar_lea.vmem %s5, %s369
      // Predicated region
      $region41: #{se_block_forward.1} parent=39 // pred_check
        %p371 = pneg %p144
      $region42: #{se_block_forward.1} parent=39 // pred_check_branch
        %373 = sbr.rel (%p371) target = $region44
      $region43: #{se_block_forward.1} parent=39 // pred_region
        _
      $region44: #{se_block_forward.1} parent=39 // pred_fallthru
        _
    $region40: #{se_block_forward.1} parent=5 // pred_fallthru
      _
    %p374 = scmp.le.s32.totalorder 2, %s11
    // Predicated region
    $region45: #{se_block_forward.1} parent=5 // pred_check
      %p375 = pneg %p374
    $region46: #{se_block_forward.1} parent=5 // pred_check_branch
      %377 = sbr.rel (%p375) target = $region48
    $region47: #{se_block_forward.1} parent=5 // pred_region
      %s378 = ssub.s32 %s11, 2
      // Predicated region
      $region49: #{se_block_forward.1} parent=47 // pred_check
        %p379 = pneg %p150
      $region50: #{se_block_forward.1} parent=47 // pred_check_branch
        %381 = sbr.rel (%p379) target = $region52
      $region51: #{se_block_forward.1} parent=47 // pred_region
        %p382 = scmp.lt.s32.totalorder %s17, 1
        %s383 = scalar_select %p382, %s17, 1
        %s384 = smul.addr %s383, 8
        %s385 = smul.addr %s384, 8
        %s386 = scalar_lea.vmem %s5, %s385
      $region52: #{se_block_forward.1} parent=47 // pred_fallthru
        _
    $region48: #{se_block_forward.1} parent=5 // pred_fallthru
      _
  $region6: #{se_block_forward.1} parent=0 // loop_footer
    %s15 = sadd.s32 1, %s11
  $region7: #{se_block_forward.1} parent=0 // loop_footer_branch
    %10 = sbr.rel target = $region3
  $region8: #{se_block_forward.1} parent=0 // loop_exit
    _

</llo_original>
